<compile_context>
chip_gen: v7x
topology: tpu7x:2x2x1
jax: 0.10.0
libtpu: 0.0.40
codegen_flags: <defaults>
</compile_context>

<pallas_src>
import functools

import jax
import jax.numpy as jnp
from jax import lax
from jax.experimental import pallas as pl
from jax.experimental.pallas import tpu as pltpu

MARGIN = 0.5
EPS = 1e-8  # matches torch.nn.functional.cosine_similarity default eps

_MIB = 1024 * 1024
_BUFFERED_OK = [hasattr(pl, "Buffered")]  # flips to False if Buffered(3) path fails


def _cdiv(a, b):
    return (a + b - 1) // b


def _round_up(a, b):
    return _cdiv(a, b) * b


def _chip_config():
    """Return (nsplit_pref, input_byte_budget, vmem_limit_bytes), conservatively."""
    vmem_phys = 64 * _MIB  # v7x-safe fallback (smallest physical VMEM per TC)
    num_tc = None
    try:
        info = pltpu.get_tpu_info()
        vmem_phys = int(getattr(info, "vmem_capacity_bytes", vmem_phys))
        for attr in ("num_tensorcores", "tensorcores_per_chip"):
            if hasattr(info, attr):
                num_tc = int(getattr(info, attr))
                break
    except Exception:
        pass
    if vmem_phys >= 96 * _MIB:
        # v5e / v6e class: 128 MiB physical VMEM, 1 TensorCore per chip.
        budget, limit = 48 * _MIB, 96 * _MIB
        if num_tc is None:
            num_tc = 1
    else:
        # v7x class: 64 MiB physical VMEM per TC, 2 TensorCores per chip.
        budget, limit = 28 * _MIB, 48 * _MIB
        if num_tc is None:
            num_tc = 2
    nsplit_pref = 2 if num_tc >= 2 else 1
    return nsplit_pref, budget, limit


def _make_spec(block_shape, index_map, buffer_depth):
    """BlockSpec with optional N-deep pipelining (guarded for API availability)."""
    if buffer_depth is not None and _BUFFERED_OK[0]:
        try:
            return pl.BlockSpec(block_shape, index_map,
                                pipeline_mode=pl.Buffered(buffer_depth))
        except TypeError:
            _BUFFERED_OK[0] = False
    return pl.BlockSpec(block_shape, index_map)


def _contrastive_kernel(x1_ref, x2_ref, lbl_ref, out_ref, *,
                        true_b, tb, tiles_per_split, has_split, needs_mask):
    if has_split:
        s = pl.program_id(0)   # core split (parallel)
        t = pl.program_id(1)   # batch tile within split (arbitrary / reduction)
    else:
        s = 0
        t = pl.program_id(0)

    # Output block index is constant along the reduction axis -> resident
    # accumulator; zero it at the first tile of each split.
    @pl.when(t == 0)
    def _():
        out_ref[...] = jnp.zeros_like(out_ref)

    x1 = x1_ref[...].astype(jnp.float32)          # (TB, D)
    x2 = x2_ref[...].astype(jnp.float32)          # (TB, D)
    lbl = lbl_ref[...].astype(jnp.float32)        # (TB, 1)

    # Row-wise cosine similarity along the feature axis.
    dot = jnp.sum(x1 * x2, axis=1, keepdims=True)     # (TB, 1)
    n1sq = jnp.sum(x1 * x1, axis=1, keepdims=True)    # (TB, 1)
    n2sq = jnp.sum(x2 * x2, axis=1, keepdims=True)    # (TB, 1)
    # cos = dot / (max(||x1||, eps) * max(||x2||, eps)), via one EUP rsqrt.
    denom_sq = jnp.maximum(n1sq, EPS * EPS) * jnp.maximum(n2sq, EPS * EPS)
    cos = dot * lax.rsqrt(denom_sq)

    dist = 1.0 - cos                                  # (TB, 1)
    hinge = jnp.maximum(MARGIN - dist, 0.0)
    per_row = (1.0 - lbl) * (dist * dist) + lbl * (hinge * hinge)

    def _accum(rows):
        out_ref[...] += jnp.sum(rows).reshape(out_ref.shape)

    if needs_mask:
        tile_idx = s * tiles_per_split + t
        row0 = tile_idx * tb
        tail = row0 + tb > true_b   # only the last real tile / phantom tiles

        @pl.when(tail)
        def _():
            row = row0 + lax.broadcasted_iota(jnp.int32, per_row.shape, 0)
            # Select (NOT multiply): padded rows may hold garbage/NaN and must
            # contribute exactly zero without propagating.
            _accum(jnp.where(row < true_b, per_row, 0.0))

        @pl.when(jnp.logical_not(tail))
        def _():
            _accum(per_row)
    else:
        _accum(per_row)


def contrastive_loss_cosine(output1, output2, label, *, block_rows=None,
                            force_split=None):
    """output1, output2: (B, D); label: (B,) -> scalar loss (f32)."""
    B, D = output1.shape
    label2d = jnp.reshape(label, (B, 1)).astype(jnp.float32)

    nsplit_pref, budget, vmem_limit = _chip_config()

    # --- tile sizing: byte-driven, no row cap ---------------------------------
    itemsize = jnp.dtype(output1.dtype).itemsize
    row_bytes = _round_up(D, 128) * itemsize        # lane-padded input row
    lbl_row_bytes = 128 * 4                         # (tb,1) f32 pads to 128 lanes
    n_buf_big, n_buf_lbl = 3, 2                     # Buffered(3) inputs, default label
    per_row_bytes = 2 * n_buf_big * row_bytes + n_buf_lbl * lbl_row_bytes

    if block_rows is None:
        tb = budget // per_row_bytes
        tb = max(8, (tb // 8) * 8)
    else:
        tb = block_rows
    if tb >= B:
        tb = B                                      # single full-batch tile

    n_tiles = _cdiv(B, tb)
    nsplit = nsplit_pref if force_split is None else force_split
    if n_tiles < 2:
        nsplit = 1
    tiles_per_split = _cdiv(n_tiles, nsplit)
    needs_mask = (nsplit * tiles_per_split * tb != B)
    has_split = nsplit > 1

    kernel = functools.partial(
        _contrastive_kernel, true_b=B, tb=tb, tiles_per_split=tiles_per_split,
        has_split=has_split, needs_mask=needs_mask)

    if has_split:
        grid = (nsplit, tiles_per_split)

        def row_map(s, t):
            # Clamp phantom trailing tiles to the last valid block; their rows
            # are masked to zero inside the kernel.
            return (jnp.minimum(s * tiles_per_split + t, n_tiles - 1), 0)

        out_map = lambda s, t: (s, 0, 0)
        dim_sem = ("parallel", "arbitrary")
    else:
        grid = (tiles_per_split,)
        row_map = lambda t: (t, 0)
        out_map = lambda t: (0, 0, 0)
        dim_sem = ("arbitrary",)

    cost = pl.CostEstimate(
        flops=int(6 * B * D + 10 * B),
        transcendentals=int(B),
        bytes_accessed=int(2 * B * D * itemsize + B * 4 + nsplit * 4),
    )

    def _call(buffer_depth):
        big_spec = _make_spec((tb, D), row_map, buffer_depth)
        lbl_spec = pl.BlockSpec((tb, 1), row_map)
        return pl.pallas_call(
            kernel,
            out_shape=jax.ShapeDtypeStruct((nsplit, 1, 1), jnp.float32),
            grid=grid,
            in_specs=[big_spec, big_spec, lbl_spec],
            out_specs=pl.BlockSpec((1, 1, 1), out_map),
            compiler_params=pltpu.CompilerParams(
                dimension_semantics=dim_sem,
                vmem_limit_bytes=vmem_limit,
            ),
            cost_estimate=cost,
        )(output1, output2, label2d)

    if _BUFFERED_OK[0]:
        try:
            partials = _call(3)
        except Exception:
            _BUFFERED_OK[0] = False
            partials = _call(None)
    else:
        partials = _call(None)

    return jnp.sum(partials) / B


def _reference(output1, output2, label):
    # Pure-JAX reference mirroring the PyTorch forward (per-norm eps clamp,
    # same as F.cosine_similarity).
    x1 = output1.astype(jnp.float32)
    x2 = output2.astype(jnp.float32)
    dot = jnp.sum(x1 * x2, axis=1)
    n1 = jnp.maximum(jnp.linalg.norm(x1, axis=1), EPS)
    n2 = jnp.maximum(jnp.linalg.norm(x2, axis=1), EPS)
    cos = dot / (n1 * n2)
    dist = 1.0 - cos
    pos = (1.0 - label) * dist ** 2
    neg = label * jnp.maximum(MARGIN - dist, 0.0) ** 2
    return jnp.mean(pos + neg)


if __name__ == "__main__":
    key = jax.random.PRNGKey(0)
    k1, k2, k3, k4, k5, k6 = jax.random.split(key, 6)

    # Case 1: small embedding batch (single tile, single split, no masking).
    B, D = 8, 32
    output1 = jax.random.normal(k1, (B, D), dtype=jnp.float32)
    output2 = jax.random.normal(k2, (B, D), dtype=jnp.float32)
    label = jax.random.bernoulli(k3, 0.5, (B,)).astype(jnp.float32)

    loss = jax.block_until_ready(contrastive_loss_cosine(output1, output2, label))
    ref = _reference(output1, output2, label)
    assert jnp.allclose(loss, ref, atol=2e-5, rtol=1e-4), (loss, ref)

    # Case 2: non-divisible batch exercising the tiled grid and edge-row
    # masking with whatever split the current chip prefers.
    B2, D2 = 40, 160
    o1b = jax.random.normal(k4, (B2, D2), dtype=jnp.float32)
    o2b = jax.random.normal(k5, (B2, D2), dtype=jnp.float32)
    lblb = jax.random.bernoulli(k6, 0.5, (B2,)).astype(jnp.float32)

    loss2 = jax.block_until_ready(
        contrastive_loss_cosine(o1b, o2b, lblb, block_rows=16))
    ref2 = _reference(o1b, o2b, lblb)
    assert jnp.allclose(loss2, ref2, atol=2e-5, rtol=1e-4), (loss2, ref2)

    # Case 3: force the 2-way core split (v7x path) with phantom-tile clamping
    # and masking, so that branch is validated regardless of the host chip.
    loss3 = jax.block_until_ready(
        contrastive_loss_cosine(o1b, o2b, lblb, block_rows=16, force_split=2))
    assert jnp.allclose(loss3, ref2, atol=2e-5, rtol=1e-4), (loss3, ref2)

    print("KERNEL_OK")
</pallas_src>

<mosaic_0001>
module attributes {stable_mosaic.version = 11 : i64} {
  func.func @_contrastive_kernel(%arg0: i32, %arg1: memref<8x32xf32, #tpu.memory_space<vmem>>, %arg2: memref<8x32xf32, #tpu.memory_space<vmem>>, %arg3: memref<8x1xf32, #tpu.memory_space<vmem>>, %arg4: memref<1x1x1xf32, #tpu.memory_space<vmem>>) attributes {dimension_semantics = [#tpu.dimension_semantics<arbitrary>], iteration_bounds = array<i64: 1>, scalar_prefetch = 0 : i64, scratch_operands = 0 : i64, tpu.core_type = #tpu.core_type<tc>, window_params = [{transform_indices = @transform_0, window_bounds = array<i64: 8, 32>}, {transform_indices = @transform_1, window_bounds = array<i64: 8, 32>}, {transform_indices = @transform_2, window_bounds = array<i64: 8, 1>}, {pipeline_mode = #tpu.pipeline_mode<synchronous>, transform_indices = @transform_3, window_bounds = array<i64: 1, 1, 1>}]} {
    %c0_i32 = arith.constant 0 : i32
    %0 = arith.cmpi eq, %arg0, %c0_i32 : i32
    %1 = arith.extui %0 : i1 to i32
    %c0_i32_0 = arith.constant 0 : i32
    %2 = arith.cmpi ne, %1, %c0_i32_0 : i32
    scf.if %2 {
      %cst_21 = arith.constant 0.000000e+00 : f32
      %43 = vector.broadcast %cst_21 : f32 to vector<1x1x1xf32>
      %c0_22 = arith.constant 0 : index
      %c0_23 = arith.constant 0 : index
      %c0_24 = arith.constant 0 : index
      %44 = vector.load %arg4[%c0_22, %c0_23, %c0_24] : memref<1x1x1xf32, #tpu.memory_space<vmem>>, vector<1x1x1xf32>
      tpu.vector_store %arg4[%c0_22, %c0_23, %c0_24], %43 {strides = array<i32>} : memref<1x1x1xf32, #tpu.memory_space<vmem>>, vector<1x1x1xf32>,
    } else {
    }
    %c0 = arith.constant 0 : index
    %c0_1 = arith.constant 0 : index
    %3 = vector.load %arg1[%c0, %c0_1] : memref<8x32xf32, #tpu.memory_space<vmem>>, vector<8x32xf32>
    %c0_2 = arith.constant 0 : index
    %c0_3 = arith.constant 0 : index
    %4 = vector.load %arg2[%c0_2, %c0_3] : memref<8x32xf32, #tpu.memory_space<vmem>>, vector<8x32xf32>
    %c0_4 = arith.constant 0 : index
    %c0_5 = arith.constant 0 : index
    %5 = vector.load %arg3[%c0_4, %c0_5] : memref<8x1xf32, #tpu.memory_space<vmem>>, vector<8x1xf32>
    %6 = arith.mulf %3, %4 : vector<8x32xf32>
    %cst = arith.constant dense<0.000000e+00> : vector<8xf32>
    %7 = vector.multi_reduction <add>, %6, %cst [1] : vector<8x32xf32> to vector<8xf32>
    %8 = vector.shape_cast %7 : vector<8xf32> to vector<8x1xf32>
    %9 = arith.mulf %3, %3 : vector<8x32xf32>
    %cst_6 = arith.constant dense<0.000000e+00> : vector<8xf32>
    %10 = vector.multi_reduction <add>, %9, %cst_6 [1] : vector<8x32xf32> to vector<8xf32>
    %11 = vector.shape_cast %10 : vector<8xf32> to vector<8x1xf32>
    %12 = arith.mulf %4, %4 : vector<8x32xf32>
    %cst_7 = arith.constant dense<0.000000e+00> : vector<8xf32>
    %13 = vector.multi_reduction <add>, %12, %cst_7 [1] : vector<8x32xf32> to vector<8xf32>
    %14 = vector.shape_cast %13 : vector<8xf32> to vector<8x1xf32>
    %cst_8 = arith.constant 1.000000e-16 : f32
    %15 = vector.broadcast %cst_8 : f32 to vector<8x1xf32>
    %16 = arith.maximumf %11, %15 : vector<8x1xf32>
    %cst_9 = arith.constant 1.000000e-16 : f32
    %17 = vector.broadcast %cst_9 : f32 to vector<8x1xf32>
    %18 = arith.maximumf %14, %17 : vector<8x1xf32>
    %19 = arith.mulf %16, %18 : vector<8x1xf32>
    %20 = math.rsqrt %19 : vector<8x1xf32>
    %21 = arith.mulf %8, %20 : vector<8x1xf32>
    %cst_10 = arith.constant 1.000000e+00 : f32
    %22 = vector.broadcast %cst_10 : f32 to vector<8x1xf32>
    %23 = arith.subf %22, %21 : vector<8x1xf32>
    %cst_11 = arith.constant 5.000000e-01 : f32
    %24 = vector.broadcast %cst_11 : f32 to vector<8x1xf32>
    %25 = arith.subf %24, %23 : vector<8x1xf32>
    %cst_12 = arith.constant 0.000000e+00 : f32
    %26 = vector.broadcast %cst_12 : f32 to vector<8x1xf32>
    %27 = arith.maximumf %25, %26 : vector<8x1xf32>
    %cst_13 = arith.constant 1.000000e+00 : f32
    %28 = vector.broadcast %cst_13 : f32 to vector<8x1xf32>
    %29 = arith.subf %28, %5 : vector<8x1xf32>
    %30 = arith.mulf %23, %23 : vector<8x1xf32>
    %31 = arith.mulf %29, %30 : vector<8x1xf32>
    %32 = arith.mulf %27, %27 : vector<8x1xf32>
    %33 = arith.mulf %5, %32 : vector<8x1xf32>
    %34 = arith.addf %31, %33 : vector<8x1xf32>
    %c0_14 = arith.constant 0 : index
    %c0_15 = arith.constant 0 : index
    %c0_16 = arith.constant 0 : index
    %35 = vector.load %arg4[%c0_14, %c0_15, %c0_16] : memref<1x1x1xf32, #tpu.memory_space<vmem>>, vector<1x1x1xf32>
    %36 = vector.shape_cast %34 : vector<8x1xf32> to vector<1x8x1xf32>
    %cst_17 = arith.constant dense<0.000000e+00> : vector<1xf32>
    %37 = vector.multi_reduction <add>, %36, %cst_17 [1, 2] : vector<1x8x1xf32> to vector<1xf32>
    %38 = vector.shape_cast %37 : vector<1xf32> to vector<1x1x1xf32>
    %39 = vector.extract %38[0, 0, 0] : f32 from vector<1x1x1xf32>
    %40 = vector.broadcast %39 : f32 to vector<1x1x1xf32>
    %41 = arith.addf %35, %40 : vector<1x1x1xf32>
    %c0_18 = arith.constant 0 : index
    %c0_19 = arith.constant 0 : index
    %c0_20 = arith.constant 0 : index
    %42 = vector.load %arg4[%c0_18, %c0_19, %c0_20] : memref<1x1x1xf32, #tpu.memory_space<vmem>>, vector<1x1x1xf32>
    tpu.vector_store %arg4[%c0_18, %c0_19, %c0_20], %41 {strides = array<i32>} : memref<1x1x1xf32, #tpu.memory_space<vmem>>, vector<1x1x1xf32>,
    return
  }
  func.func @transform_0(%arg0: i32) -> (i32, i32) {
    %c0_i32 = arith.constant 0 : i32
    %c0_i32_0 = arith.constant 0 : i32
    return %arg0, %c0_i32 : i32, i32
  }
  func.func @transform_1(%arg0: i32) -> (i32, i32) {
    %c0_i32 = arith.constant 0 : i32
    %c0_i32_0 = arith.constant 0 : i32
    return %arg0, %c0_i32 : i32, i32
  }
  func.func @transform_2(%arg0: i32) -> (i32, i32) {
    %c0_i32 = arith.constant 0 : i32
    %c0_i32_0 = arith.constant 0 : i32
    return %arg0, %c0_i32 : i32, i32
  }
  func.func @transform_3(%arg0: i32) -> (i32, i32, i32) {
    %c0_i32 = arith.constant 0 : i32
    %c0_i32_0 = arith.constant 0 : i32
    %c0_i32_1 = arith.constant 0 : i32
    %c0_i32_2 = arith.constant 0 : i32
    return %c0_i32, %c0_i32_0, %c0_i32_1 : i32, i32, i32
  }
}

</mosaic_0001>

<llo_original>
// kernel: tpu_custom_call.1
$region0: #{tpu_custom_call.1}
  #allocation0 [shape = 'u32[]', space=smem, size = 0x4, offset = 0x4, fixed_abs, tag = 'smem constant byte address 0x4 - core index']
  #allocation1 [shape = 'u32[144,128]{1,0:T(1,128)}', space=vmem, size = 0x12000, scoped, tag = 'internal scratch']
  %s0 = inlined_call_operand.vmem [shape: f32[8,32], index: 0, kind: input, shape index: {}]
  %s1 = inlined_call_operand.hbm [shape: f32[8,32], index: 1, kind: input, shape index: {}]
  %s2 = inlined_call_operand.vmem [shape: f32[8,1], index: 2, kind: input, shape index: {}]
  %s3 = inlined_call_operand.hbm [shape: f32[1,1,1], index: 3, kind: output, shape index: {}]
  %s4 = sld [smem:[#allocation0]]
  $region30: #{tpu_custom_call.1} parent=0
    _
  %s6 = ssub.s32 1, %s4
  %s7 = scalar_select 0, %s6, %s4
  $region1: #{tpu_custom_call.1} parent=0
    #allocation2 [shape = 'u8[4096]{0}', space=vmem, size = 0x1000, scoped, tag = 'input window, operand 1, single buffered']
    #allocation3 [shape = 's32[1]{0}', space=sflag, size = 0x4, scoped, tag = 'scoped memory for tpu_custom_call.1']
    #allocation4 [shape = 's32[1]{0}', space=sflag, size = 0x4, scoped, tag = 'scoped memory for tpu_custom_call.1']
    #allocation5 [shape = 'u8[512]{0}', space=vmem, size = 0x400, scoped, tag = 'output window, operand 0, single buffered']
    %8 = vsyncpa [#allocation3], 0
    %9 = vsyncpa [#allocation4], 0
    // Predicated region
    $region2: #{tpu_custom_call.1} parent=1 // pred_check
      _
    $region3: #{tpu_custom_call.1} parent=1 // pred_check_branch
      %11 = sbr.rel (0) target = $region5
    $region4: #{tpu_custom_call.1} parent=1 // pred_region
      _
    $region5: #{tpu_custom_call.1} parent=1 // pred_fallthru
      _
    // Predicated region
    $region6: #{tpu_custom_call.1} parent=1 // pred_check
      _
    $region7: #{tpu_custom_call.1} parent=1 // pred_check_branch
      %13 = sbr.rel (0) target = $region9
    $region8: #{tpu_custom_call.1} parent=1 // pred_region
      %s15 = ssub.s32 128, 128
      %16 = vsyncadd [#allocation3], %s15
      %s18 = sshll.u32 [#allocation2], 4
      %s19 = int_to_ptr.vmem [resolvable:$true] %s18
      %21 = dma.hbm_to_vmem [thread:$0]  %s1, 128, %s19, [#allocation3]
    $region9: #{tpu_custom_call.1} parent=1 // pred_fallthru
      _
    // Predicated region
    $region10: #{tpu_custom_call.1} parent=1 // pred_check
      _
    $region11: #{tpu_custom_call.1} parent=1 // pred_check_branch
      %23 = sbr.rel (0) target = $region13
    $region12: #{tpu_custom_call.1} parent=1 // pred_region
      _
    $region13: #{tpu_custom_call.1} parent=1 // pred_fallthru
      _
    // Predicated region
    $region14: #{tpu_custom_call.1} parent=1 // pred_check
      _
    $region15: #{tpu_custom_call.1} parent=1 // pred_check_branch
      %25 = sbr.rel (0) target = $region17
    $region16: #{tpu_custom_call.1} parent=1 // pred_region
      %26 = dma.done [#allocation3], 128
    $region17: #{tpu_custom_call.1} parent=1 // pred_fallthru
      _
    %p27 = scmp.eq.s32.totalorder 0, 0
    // Predicated region
    $region18: #{tpu_custom_call.1} parent=1 // pred_check
      %p28 = pneg %p27
    $region19: #{tpu_custom_call.1} parent=1 // pred_check_branch
      %30 = sbr.rel (%p28) target = $region21
    $region20: #{tpu_custom_call.1} parent=1 // pred_region
      %vm31 = vcmask 0
      %32 = vst.msk [vmem:[#allocation5] sm:$0x1] %vm31, 0.0
    $region21: #{tpu_custom_call.1} parent=1 // pred_fallthru
      _
    %v33 = vld [vmem:[%s0] sm:$0xff]
    %v34 = vld [vmem:[#allocation2] sm:$0xff]
    %v35 = vld [vmem:[%s2] sm:$0xff]
    %v36 = vmul.f32 %v33, %v34
    %vm37 = vcmask 261120
    %v38 = vsel %vm37, %v36, 0.0
    %39 = vadd.xlane.f32.xlu0 %v38
    %v40 = vpop.xlane.xlu0 %39
    %v41 = vmul.f32 %v33, %v33
    %v42 = vsel %vm37, %v41, 0.0
    %43 = vadd.xlane.f32.xlu0 %v42
    %v44 = vpop.xlane.xlu0 %43
    %v45 = vmul.f32 %v34, %v34
    %v46 = vsel %vm37, %v45, 0.0
    %47 = vadd.xlane.f32.xlu0 %v46
    %v48 = vpop.xlane.xlu0 %47
    %v49 = vmax.f32 %v44, 1e-16
    %v50 = vmax.f32 %v48, 1e-16
    %v51 = vmul.f32 %v49, %v50
    %v52 = vrsqrt.pop %v51
    %v53 = vmul.f32 %v40, %v52
    %v54 = vsub.f32 1.0, %v53
    %v55 = vsub.f32 0.5, %v54
    %v56 = vmax.f32 %v55, 0.0
    %v57 = vsub.f32 1.0, %v35
    %v58 = vmul.f32 %v54, %v54
    %v59 = vmul.f32 %v57, %v58
    %v60 = vmul.f32 %v56, %v56
    %v61 = vmul.f32 %v35, %v60
    %v62 = vadd.f32 %v59, %v61
    %v63 = vld [vmem:[#allocation5] sm:$0x1]
    %vm64 = vcmask 7168
    %v65 = vsel %vm64, %v62, 0.0
    %66 = vadd.xlane.f32.xlu0 %v65
    %v67 = vpop.xlane.xlu0 %66
    %v68 = vrot.slane %v67, 4
    %v69 = vadd.f32 %v67, %v68
    %v70 = vrot.slane %v69, 2
    %v71 = vadd.f32 %v69, %v70
    %v72 = vrot.slane %v71, 1
    %v73 = vadd.f32 %v71, %v72
    %s74 = vtos %v73
    %v75 = vstv %s74
    %v76 = vadd.f32 %v63, %v75
    %vm77 = vcmask 0
    %78 = vst.msk [vmem:[#allocation5] sm:$0x1] %vm77, %v76
    // Predicated region
    $region22: #{tpu_custom_call.1} parent=1 // pred_check
      _
    $region23: #{tpu_custom_call.1} parent=1 // pred_check_branch
      %80 = sbr.rel (0) target = $region25
    $region24: #{tpu_custom_call.1} parent=1 // pred_region
      %s82 = ssub.s32 16, 16
      %83 = vsyncadd [#allocation4], %s82
      %s85 = sshll.u32 [#allocation5], 4
      %s86 = int_to_ptr.vmem [resolvable:$true] %s85
      %88 = dma.vmem_to_hbm [thread:$0]  %s86, 16, %s3, [#allocation4]
    $region25: #{tpu_custom_call.1} parent=1 // pred_fallthru
      _
    // Predicated region
    $region26: #{tpu_custom_call.1} parent=1 // pred_check
      _
    $region27: #{tpu_custom_call.1} parent=1 // pred_check_branch
      %90 = sbr.rel (0) target = $region29
    $region28: #{tpu_custom_call.1} parent=1 // pred_region
      %91 = dma.done [#allocation4], 16
    $region29: #{tpu_custom_call.1} parent=1 // pred_fallthru
      _
    %92 = vsyncpa [#allocation3], 1
    %93 = vsyncpa [#allocation4], 1

</llo_original>
